<compile_context>
chip_gen: v6e
topology: v6e:2x2x1
jax: 0.10.0
libtpu: 0.0.40
codegen_flags: <defaults>
</compile_context>

<pallas_src>
import functools

import jax
import jax.numpy as jnp
from jax.experimental import pallas as pl
from jax.experimental.pallas import tpu as pltpu


def _round_up(x: int, m: int) -> int:
    return ((x + m - 1) // m) * m


def _anat_attn_kernel(
    x_ref,       # (TM, F)      folded (batch*disease) feature rows, bf16
    kt_ref,      # (F, R_PAD)   pre-transposed, pre-scaled key projections, bf16
    v_ref,       # (R_PAD, F)   zero-padded value projections, bf16
    wq_ref,      # (F, F)       query weight (y = x @ w), bf16
    bq_ref,      # (1, F)       query bias, f32
    bias_ref,    # (1, R_PAD)   additive mask: 0 real cols, -1e30 padded cols, f32
    gamma_ref,   # (1, F)       LayerNorm scale, f32
    beta_ref,    # (1, F)       LayerNorm shift, f32
    out_ref,     # (TM, F)      attended + normalized features
    attn_ref,    # (TM, R)      attention weights (narrow store, real cols only)
    *,
    eps: float,
    num_regions: int,
):
    x = x_ref[...]                                                  # (TM, F) bf16

    # Q projection: bf16 MXU matmul, f32 accumulate, f32 bias add.
    q = jnp.dot(x, wq_ref[...], preferred_element_type=jnp.float32) + bq_ref[...]

    # Scores against pre-scaled K^T: (TM, R_PAD), lane-dense. Scale already
    # folded into kt; padded columns masked via the additive bias row.
    scores = jnp.dot(q.astype(kt_ref.dtype), kt_ref[...],
                     preferred_element_type=jnp.float32)
    scores = scores + bias_ref[...]

    # Softmax over regions, max-stabilized, EXACT division (rows sum to 1).
    m = jnp.max(scores, axis=-1, keepdims=True)
    e = jnp.exp(scores - m)
    denom = jnp.sum(e, axis=-1, keepdims=True)
    attn = e / denom                                                # (TM, R_PAD) f32

    # Attend: padded V rows are zero and their weights are exactly 0.
    attended = jnp.dot(attn.astype(v_ref.dtype), v_ref[...],
                       preferred_element_type=jnp.float32)          # (TM, F) f32

    # LayerNorm over the feature dim (biased variance, torch eps), in f32.
    mean = jnp.mean(attended, axis=-1, keepdims=True)
    centered = attended - mean
    var = jnp.mean(centered * centered, axis=-1, keepdims=True)
    normed = centered * jax.lax.rsqrt(var + eps) * gamma_ref[...] + beta_ref[...]

    out_ref[...] = normed.astype(out_ref.dtype)
    # Narrow writeback: only the real region columns (cuts HBM write traffic).
    attn_ref[...] = attn[:, :num_regions].astype(attn_ref.dtype)


def anatomical_attention(features, region_embeddings, params, *, eps=1e-5,
                         tile_m=512, compute_dtype=jnp.bfloat16, out_dtype=None):
    """features: (B, D, F); region_embeddings: (R, F); params: projections/LN.

    Returns (attended_features (B, D, F), attention_weights (B, D, R) f32).
    """
    B, D, F = features.shape
    R = region_embeddings.shape[0]
    scale = float(F) ** -0.5
    f32 = jnp.float32
    out_dtype = features.dtype if out_dtype is None else out_dtype
    r_pad = _round_up(max(R, 1), 128)   # lane-dense padded region axis

    # --- Hoisted K/V projections (batch-independent; computed once in f32).
    reg = region_embeddings.astype(f32)
    k = reg @ params["wk"].astype(f32) + params["bk"].astype(f32)
    v = reg @ params["wv"].astype(f32) + params["bv"].astype(f32)
    # Pre-transpose K to (F, R_PAD) and fold the attention scale in once.
    kt_pad = jnp.zeros((F, r_pad), f32).at[:, :R].set(k.T * scale).astype(compute_dtype)
    v_pad = jnp.zeros((r_pad, F), f32).at[:R, :].set(v).astype(compute_dtype)
    # Additive softmax mask row: 0 for real region columns, -1e30 for padding.
    bias_row = jnp.where(jnp.arange(r_pad) < R, 0.0, -1e30).astype(f32).reshape(1, r_pad)

    # --- Fold batch into rows: (B*D, F). No wrapper pad; Pallas handles a
    # ragged last row block (tail rows' writes are dropped).
    M = B * D
    x2d = features.reshape(M, F).astype(compute_dtype)

    # --- Row-tile size: large (amortize ~0.35us/step, fill MXU M dim),
    # 8-aligned, >=2 grid steps for big problems (v7x megacore), shrunk until
    # the double-buffered working set fits a VMEM budget safe on all gens.
    tm = int(tile_m)
    if M <= tm:
        tm = _round_up((M + 1) // 2, 256) if M >= 1024 else M
    else:
        tm = _round_up(tm, 8)

    out_isz = jnp.dtype(out_dtype).itemsize
    cds = jnp.dtype(compute_dtype).itemsize

    def _vmem_est(t):
        io = 2 * t * F * cds + 2 * t * F * out_isz + 2 * t * R * 4       # double-buffered tiles
        shared = 2 * (2 * F * r_pad * cds + F * F * cds + 3 * F * 4 + r_pad * 4)
        live = 3 * t * r_pad * 4 + 2 * t * F * 4                          # f32 intermediates
        return io + shared + live

    vmem_budget = 32 * 1024 * 1024
    while tm > 256 and _vmem_est(tm) > vmem_budget:
        tm = _round_up(tm // 2, 8)

    num_tiles = pl.cdiv(M, tm)

    kernel = functools.partial(_anat_attn_kernel, eps=float(eps), num_regions=R)

    def shared_spec(shape):
        # Constant index map -> loaded once, stays resident across grid steps.
        return pl.BlockSpec(shape, lambda i: (0, 0))

    out2d, attn2d = pl.pallas_call(
        kernel,
        out_shape=(
            jax.ShapeDtypeStruct((M, F), out_dtype),
            jax.ShapeDtypeStruct((M, R), f32),
        ),
        grid_spec=pltpu.PrefetchScalarGridSpec(
            num_scalar_prefetch=0,
            grid=(num_tiles,),
            in_specs=[
                pl.BlockSpec((tm, F), lambda i: (i, 0)),   # folded feature rows
                shared_spec((F, r_pad)),                   # K^T (scaled, padded)
                shared_spec((r_pad, F)),                   # V (padded)
                shared_spec((F, F)),                       # Wq
                shared_spec((1, F)),                       # bq
                shared_spec((1, r_pad)),                   # additive mask row
                shared_spec((1, F)),                       # gamma
                shared_spec((1, F)),                       # beta
            ],
            out_specs=[
                pl.BlockSpec((tm, F), lambda i: (i, 0)),
                pl.BlockSpec((tm, R), lambda i: (i, 0)),   # narrow attn writeback
            ],
        ),
        compiler_params=pltpu.CompilerParams(
            dimension_semantics=("parallel",),
            vmem_limit_bytes=40 * 1024 * 1024,
        ),
    )(
        x2d,
        kt_pad,
        v_pad,
        params["wq"].astype(compute_dtype),
        params["bq"].reshape(1, F).astype(f32),
        bias_row,
        params["gamma"].reshape(1, F).astype(f32),
        params["beta"].reshape(1, F).astype(f32),
    )

    return out2d.reshape(B, D, F), attn2d.reshape(B, D, R)


def _reference(features, region_embeddings, params, eps=1e-5):
    """Pure-JAX (f32) reference mirroring the PyTorch forward."""
    F = features.shape[-1]
    scale = float(F) ** -0.5
    q = features @ params["wq"] + params["bq"]
    k = region_embeddings @ params["wk"] + params["bk"]
    v = region_embeddings @ params["wv"] + params["bv"]
    scores = jnp.einsum("bdf,rf->bdr", q, k) * scale
    attn = jax.nn.softmax(scores, axis=-1)
    attended = jnp.einsum("bdr,rf->bdf", attn, v)
    mean = attended.mean(-1, keepdims=True)
    var = ((attended - mean) ** 2).mean(-1, keepdims=True)
    normed = (attended - mean) * jax.lax.rsqrt(var + eps)
    normed = normed * params["gamma"] + params["beta"]
    return normed, attn


if __name__ == "__main__":
    # Small shapes consistent with the module.
    B = 2            # batch
    D = 8            # num_diseases (query tokens)
    R = 7            # num_regions (matches _initialize_region_weights hint)
    F = 32           # feature_dim

    key = jax.random.PRNGKey(0)
    keys = jax.random.split(key, 10)

    features = jax.random.normal(keys[0], (B, D, F), dtype=jnp.float32)
    region_embeddings = jax.random.normal(keys[1], (R, F), dtype=jnp.float32)

    params = {
        # Linear weights stored so that y = x @ w + b (i.e. w == torch_weight.T).
        "wq": jax.random.normal(keys[2], (F, F), dtype=jnp.float32) * 0.1,
        "bq": jax.random.normal(keys[3], (F,), dtype=jnp.float32) * 0.01,
        "wk": jax.random.normal(keys[4], (F, F), dtype=jnp.float32) * 0.1,
        "bk": jax.random.normal(keys[5], (F,), dtype=jnp.float32) * 0.01,
        "wv": jax.random.normal(keys[6], (F, F), dtype=jnp.float32) * 0.1,
        "bv": jax.random.normal(keys[7], (F,), dtype=jnp.float32) * 0.01,
        "gamma": jnp.ones((F,), dtype=jnp.float32),
        "beta": jnp.zeros((F,), dtype=jnp.float32),
    }

    out, attn = anatomical_attention(features, region_embeddings, params)
    jax.block_until_ready((out, attn))

    # Correctness check against the f32 pure-JAX reference. Tolerances account
    # for bf16 MXU operands (softmax/LayerNorm statistics are kept in f32 and
    # the softmax uses an exact divide, so rows sum to 1 to f32 precision).
    ref_out, ref_attn = _reference(features, region_embeddings, params)
    assert out.shape == (B, D, F) and attn.shape == (B, D, R)
    assert jnp.allclose(out, ref_out, atol=3e-2, rtol=3e-2), "attended features mismatch"
    assert jnp.allclose(attn, ref_attn, atol=1e-2, rtol=1e-2), "attention weights mismatch"
    assert jnp.allclose(jnp.sum(attn, axis=-1), 1.0, atol=1e-3), "softmax rows must sum to 1"

    print("KERNEL_OK")
</pallas_src>

<mosaic_0001>
module attributes {stable_mosaic.version = 11 : i64} {
  func.func @_anat_attn_kernel(%arg0: i32, %arg1: memref<16x32xbf16, #tpu.memory_space<vmem>>, %arg2: memref<32x128xbf16, #tpu.memory_space<vmem>>, %arg3: memref<128x32xbf16, #tpu.memory_space<vmem>>, %arg4: memref<32x32xbf16, #tpu.memory_space<vmem>>, %arg5: memref<1x32xf32, #tpu.memory_space<vmem>>, %arg6: memref<1x128xf32, #tpu.memory_space<vmem>>, %arg7: memref<1x32xf32, #tpu.memory_space<vmem>>, %arg8: memref<1x32xf32, #tpu.memory_space<vmem>>, %arg9: memref<16x32xf32, #tpu.memory_space<vmem>>, %arg10: memref<16x7xf32, #tpu.memory_space<vmem>>) attributes {dimension_semantics = [#tpu.dimension_semantics<parallel>], iteration_bounds = array<i64: 1>, scalar_prefetch = 0 : i64, scratch_operands = 0 : i64, tpu.core_type = #tpu.core_type<tc>, window_params = [{transform_indices = @transform_0, window_bounds = array<i64: 16, 32>}, {pipeline_mode = #tpu.pipeline_mode<synchronous>, transform_indices = @transform_1, window_bounds = array<i64: 32, 128>}, {pipeline_mode = #tpu.pipeline_mode<synchronous>, transform_indices = @transform_2, window_bounds = array<i64: 128, 32>}, {pipeline_mode = #tpu.pipeline_mode<synchronous>, transform_indices = @transform_3, window_bounds = array<i64: 32, 32>}, {pipeline_mode = #tpu.pipeline_mode<synchronous>, transform_indices = @transform_4, window_bounds = array<i64: 1, 32>}, {pipeline_mode = #tpu.pipeline_mode<synchronous>, transform_indices = @transform_5, window_bounds = array<i64: 1, 128>}, {pipeline_mode = #tpu.pipeline_mode<synchronous>, transform_indices = @transform_6, window_bounds = array<i64: 1, 32>}, {pipeline_mode = #tpu.pipeline_mode<synchronous>, transform_indices = @transform_7, window_bounds = array<i64: 1, 32>}, {transform_indices = @transform_8, window_bounds = array<i64: 16, 32>}, {transform_indices = @transform_9, window_bounds = array<i64: 16, 7>}]} {
    %c0 = arith.constant 0 : index
    %c0_0 = arith.constant 0 : index
    %0 = vector.load %arg1[%c0, %c0_0] : memref<16x32xbf16, #tpu.memory_space<vmem>>, vector<16x32xbf16>
    %c0_1 = arith.constant 0 : index
    %c0_2 = arith.constant 0 : index
    %1 = vector.load %arg4[%c0_1, %c0_2] : memref<32x32xbf16, #tpu.memory_space<vmem>>, vector<32x32xbf16>
    %cst = arith.constant dense<0.000000e+00> : vector<16x32xf32>
    %2 = tpu.matmul %0, %1, %cst {dimension_numbers = #tpu.dot_dimension_numbers<[1], [0], [0], [1], [0, 0, 1, 1], [], []>} : vector<16x32xbf16>, vector<32x32xbf16>, vector<16x32xf32> -> vector<16x32xf32>
    %c0_3 = arith.constant 0 : index
    %c0_4 = arith.constant 0 : index
    %3 = vector.load %arg5[%c0_3, %c0_4] : memref<1x32xf32, #tpu.memory_space<vmem>>, vector<1x32xf32>
    %4 = vector.broadcast %3 : vector<1x32xf32> to vector<16x32xf32>
    %5 = arith.addf %2, %4 : vector<16x32xf32>
    %6 = arith.truncf %5 : vector<16x32xf32> to vector<16x32xbf16>
    %c0_5 = arith.constant 0 : index
    %c0_6 = arith.constant 0 : index
    %7 = vector.load %arg2[%c0_5, %c0_6] : memref<32x128xbf16, #tpu.memory_space<vmem>>, vector<32x128xbf16>
    %cst_7 = arith.constant dense<0.000000e+00> : vector<16x128xf32>
    %8 = tpu.matmul %6, %7, %cst_7 {dimension_numbers = #tpu.dot_dimension_numbers<[1], [0], [0], [1], [0, 0, 1, 1], [], []>} : vector<16x32xbf16>, vector<32x128xbf16>, vector<16x128xf32> -> vector<16x128xf32>
    %c0_8 = arith.constant 0 : index
    %c0_9 = arith.constant 0 : index
    %9 = vector.load %arg6[%c0_8, %c0_9] : memref<1x128xf32, #tpu.memory_space<vmem>>, vector<1x128xf32>
    %10 = vector.broadcast %9 : vector<1x128xf32> to vector<16x128xf32>
    %11 = arith.addf %8, %10 : vector<16x128xf32>
    %cst_10 = arith.constant dense<0xFF800000> : vector<16xf32>
    %12 = vector.multi_reduction <maximumf>, %11, %cst_10 [1] : vector<16x128xf32> to vector<16xf32>
    %13 = vector.shape_cast %12 : vector<16xf32> to vector<16x1xf32>
    %14 = vector.broadcast %13 : vector<16x1xf32> to vector<16x128xf32>
    %15 = arith.subf %11, %14 : vector<16x128xf32>
    %16 = math.exp %15 : vector<16x128xf32>
    %cst_11 = arith.constant dense<0.000000e+00> : vector<16xf32>
    %17 = vector.multi_reduction <add>, %16, %cst_11 [1] : vector<16x128xf32> to vector<16xf32>
    %18 = vector.shape_cast %17 : vector<16xf32> to vector<16x1xf32>
    %19 = vector.broadcast %18 : vector<16x1xf32> to vector<16x128xf32>
    %20 = arith.divf %16, %19 : vector<16x128xf32>
    %21 = arith.truncf %20 : vector<16x128xf32> to vector<16x128xbf16>
    %c0_12 = arith.constant 0 : index
    %c0_13 = arith.constant 0 : index
    %22 = vector.load %arg3[%c0_12, %c0_13] : memref<128x32xbf16, #tpu.memory_space<vmem>>, vector<128x32xbf16>
    %cst_14 = arith.constant dense<0.000000e+00> : vector<16x32xf32>
    %23 = tpu.matmul %21, %22, %cst_14 {dimension_numbers = #tpu.dot_dimension_numbers<[1], [0], [0], [1], [0, 0, 1, 1], [], []>} : vector<16x128xbf16>, vector<128x32xbf16>, vector<16x32xf32> -> vector<16x32xf32>
    %cst_15 = arith.constant dense<0.000000e+00> : vector<16xf32>
    %24 = vector.multi_reduction <add>, %23, %cst_15 [1] : vector<16x32xf32> to vector<16xf32>
    %25 = vector.shape_cast %24 : vector<16xf32> to vector<16x1xf32>
    %cst_16 = arith.constant 3.200000e+01 : f32
    %26 = vector.broadcast %cst_16 : f32 to vector<16x1xf32>
    %27 = arith.divf %25, %26 : vector<16x1xf32>
    %28 = vector.broadcast %27 : vector<16x1xf32> to vector<16x32xf32>
    %29 = arith.subf %23, %28 : vector<16x32xf32>
    %30 = arith.mulf %29, %29 : vector<16x32xf32>
    %cst_17 = arith.constant dense<0.000000e+00> : vector<16xf32>
    %31 = vector.multi_reduction <add>, %30, %cst_17 [1] : vector<16x32xf32> to vector<16xf32>
    %32 = vector.shape_cast %31 : vector<16xf32> to vector<16x1xf32>
    %cst_18 = arith.constant 3.200000e+01 : f32
    %33 = vector.broadcast %cst_18 : f32 to vector<16x1xf32>
    %34 = arith.divf %32, %33 : vector<16x1xf32>
    %cst_19 = arith.constant 9.99999974E-6 : f32
    %35 = vector.broadcast %cst_19 : f32 to vector<16x1xf32>
    %36 = arith.addf %34, %35 : vector<16x1xf32>
    %37 = math.rsqrt %36 : vector<16x1xf32>
    %38 = vector.broadcast %37 : vector<16x1xf32> to vector<16x32xf32>
    %39 = arith.mulf %29, %38 : vector<16x32xf32>
    %c0_20 = arith.constant 0 : index
    %c0_21 = arith.constant 0 : index
    %40 = vector.load %arg7[%c0_20, %c0_21] : memref<1x32xf32, #tpu.memory_space<vmem>>, vector<1x32xf32>
    %41 = vector.broadcast %40 : vector<1x32xf32> to vector<16x32xf32>
    %42 = arith.mulf %39, %41 : vector<16x32xf32>
    %c0_22 = arith.constant 0 : index
    %c0_23 = arith.constant 0 : index
    %43 = vector.load %arg8[%c0_22, %c0_23] : memref<1x32xf32, #tpu.memory_space<vmem>>, vector<1x32xf32>
    %44 = vector.broadcast %43 : vector<1x32xf32> to vector<16x32xf32>
    %45 = arith.addf %42, %44 : vector<16x32xf32>
    %c0_24 = arith.constant 0 : index
    %c0_25 = arith.constant 0 : index
    %46 = vector.load %arg9[%c0_24, %c0_25] : memref<16x32xf32, #tpu.memory_space<vmem>>, vector<16x32xf32>
    tpu.vector_store %arg9[%c0_24, %c0_25], %45 {strides = array<i32>} : memref<16x32xf32, #tpu.memory_space<vmem>>, vector<16x32xf32>,
    %47 = vector.extract_strided_slice %20 {offsets = [0, 0], sizes = [16, 7], strides = [1, 1]} : vector<16x128xf32> to vector<16x7xf32>
    %c0_26 = arith.constant 0 : index
    %c0_27 = arith.constant 0 : index
    %48 = vector.load %arg10[%c0_26, %c0_27] : memref<16x7xf32, #tpu.memory_space<vmem>>, vector<16x7xf32>
    tpu.vector_store %arg10[%c0_26, %c0_27], %47 {strides = array<i32>} : memref<16x7xf32, #tpu.memory_space<vmem>>, vector<16x7xf32>,
    return
  }
  func.func @transform_0(%arg0: i32) -> (i32, i32) {
    %c0_i32 = arith.constant 0 : i32
    %c0_i32_0 = arith.constant 0 : i32
    return %arg0, %c0_i32 : i32, i32
  }
  func.func @transform_1(%arg0: i32) -> (i32, i32) {
    %c0_i32 = arith.constant 0 : i32
    %c0_i32_0 = arith.constant 0 : i32
    %c0_i32_1 = arith.constant 0 : i32
    return %c0_i32, %c0_i32_0 : i32, i32
  }
  func.func @transform_2(%arg0: i32) -> (i32, i32) {
    %c0_i32 = arith.constant 0 : i32
    %c0_i32_0 = arith.constant 0 : i32
    %c0_i32_1 = arith.constant 0 : i32
    return %c0_i32, %c0_i32_0 : i32, i32
  }
  func.func @transform_3(%arg0: i32) -> (i32, i32) {
    %c0_i32 = arith.constant 0 : i32
    %c0_i32_0 = arith.constant 0 : i32
    %c0_i32_1 = arith.constant 0 : i32
    return %c0_i32, %c0_i32_0 : i32, i32
  }
  func.func @transform_4(%arg0: i32) -> (i32, i32) {
    %c0_i32 = arith.constant 0 : i32
    %c0_i32_0 = arith.constant 0 : i32
    %c0_i32_1 = arith.constant 0 : i32
    return %c0_i32, %c0_i32_0 : i32, i32
  }
  func.func @transform_5(%arg0: i32) -> (i32, i32) {
    %c0_i32 = arith.constant 0 : i32
    %c0_i32_0 = arith.constant 0 : i32
    %c0_i32_1 = arith.constant 0 : i32
    return %c0_i32, %c0_i32_0 : i32, i32
  }
  func.func @transform_6(%arg0: i32) -> (i32, i32) {
    %c0_i32 = arith.constant 0 : i32
    %c0_i32_0 = arith.constant 0 : i32
    %c0_i32_1 = arith.constant 0 : i32
    return %c0_i32, %c0_i32_0 : i32, i32
  }
  func.func @transform_7(%arg0: i32) -> (i32, i32) {
    %c0_i32 = arith.constant 0 : i32
    %c0_i32_0 = arith.constant 0 : i32
    %c0_i32_1 = arith.constant 0 : i32
    return %c0_i32, %c0_i32_0 : i32, i32
  }
  func.func @transform_8(%arg0: i32) -> (i32, i32) {
    %c0_i32 = arith.constant 0 : i32
    %c0_i32_0 = arith.constant 0 : i32
    return %arg0, %c0_i32 : i32, i32
  }
  func.func @transform_9(%arg0: i32) -> (i32, i32) {
    %c0_i32 = arith.constant 0 : i32
    %c0_i32_0 = arith.constant 0 : i32
    return %arg0, %c0_i32 : i32, i32
  }
}

</mosaic_0001>

<llo_original>
// kernel: tpu_custom_call.1
$region0: #{tpu_custom_call.1}
  #allocation0 [shape = 'u32[]', space=smem, size = 0x4, offset = 0x4, fixed_abs, tag = 'smem constant byte address 0x4 - core index']
  #allocation1 [shape = 'u32[144,128]{1,0:T(1,128)}', space=vmem, size = 0x12000, scoped, tag = 'internal scratch']
  %s0 = inlined_call_operand.vmem [shape: bf16[16,32], index: 0, kind: input, shape index: {}]
  %s1 = inlined_call_operand.vmem [shape: bf16[32,128], index: 1, kind: input, shape index: {}]
  %s2 = inlined_call_operand.vmem [shape: bf16[128,32], index: 2, kind: input, shape index: {}]
  %s3 = inlined_call_operand.vmem [shape: bf16[32,32], index: 3, kind: input, shape index: {}]
  %s4 = inlined_call_operand.vmem [shape: f32[1,32], index: 4, kind: input, shape index: {}]
  %s5 = inlined_call_operand.vmem [shape: f32[1,128], index: 5, kind: input, shape index: {}]
  %s6 = inlined_call_operand.vmem [shape: f32[1,32], index: 6, kind: input, shape index: {}]
  %s7 = inlined_call_operand.vmem [shape: f32[1,32], index: 7, kind: input, shape index: {}]
  %s8 = inlined_call_operand.hbm [shape: f32[16,32], index: 8, kind: output, shape index: {0}]
  %s9 = inlined_call_operand.vmem [shape: f32[16,7], index: 9, kind: output, shape index: {1}]
  %10 = xla_tuple %s8, %s9
  %s11 = sld [smem:[#allocation0]]
  $region50: #{tpu_custom_call.1} parent=0
    _
  %s13 = ssub.s32 1, %s11
  %s14 = scalar_select 0, %s13, %s11
  $region1: #{tpu_custom_call.1} parent=0
    #allocation2 [shape = 'u8[8192]{0}', space=vmem, size = 0x2000, scoped, tag = 'output window, operand 0, single buffered']
    #allocation3 [shape = 's32[1]{0}', space=sflag, size = 0x4, scoped, tag = 'scoped memory for tpu_custom_call.1']
    %15 = vsyncpa [#allocation3], 0
    // Predicated region
    $region2: #{tpu_custom_call.1} parent=1 // pred_check
      _
    $region3: #{tpu_custom_call.1} parent=1 // pred_check_branch
      %17 = sbr.rel (0) target = $region5
    $region4: #{tpu_custom_call.1} parent=1 // pred_region
      _
    $region5: #{tpu_custom_call.1} parent=1 // pred_fallthru
      _
    // Predicated region
    $region6: #{tpu_custom_call.1} parent=1 // pred_check
      _
    $region7: #{tpu_custom_call.1} parent=1 // pred_check_branch
      %19 = sbr.rel (0) target = $region9
    $region8: #{tpu_custom_call.1} parent=1 // pred_region
      _
    $region9: #{tpu_custom_call.1} parent=1 // pred_fallthru
      _
    // Predicated region
    $region10: #{tpu_custom_call.1} parent=1 // pred_check
      _
    $region11: #{tpu_custom_call.1} parent=1 // pred_check_branch
      %21 = sbr.rel (0) target = $region13
    $region12: #{tpu_custom_call.1} parent=1 // pred_region
      _
    $region13: #{tpu_custom_call.1} parent=1 // pred_fallthru
      _
    // Predicated region
    $region14: #{tpu_custom_call.1} parent=1 // pred_check
      _
    $region15: #{tpu_custom_call.1} parent=1 // pred_check_branch
      %23 = sbr.rel (0) target = $region17
    $region16: #{tpu_custom_call.1} parent=1 // pred_region
      _
    $region17: #{tpu_custom_call.1} parent=1 // pred_fallthru
      _
    // Predicated region
    $region18: #{tpu_custom_call.1} parent=1 // pred_check
      _
    $region19: #{tpu_custom_call.1} parent=1 // pred_check_branch
      %25 = sbr.rel (0) target = $region21
    $region20: #{tpu_custom_call.1} parent=1 // pred_region
      _
    $region21: #{tpu_custom_call.1} parent=1 // pred_fallthru
      _
    // Predicated region
    $region22: #{tpu_custom_call.1} parent=1 // pred_check
      _
    $region23: #{tpu_custom_call.1} parent=1 // pred_check_branch
      %27 = sbr.rel (0) target = $region25
    $region24: #{tpu_custom_call.1} parent=1 // pred_region
      _
    $region25: #{tpu_custom_call.1} parent=1 // pred_fallthru
      _
    // Predicated region
    $region26: #{tpu_custom_call.1} parent=1 // pred_check
      _
    $region27: #{tpu_custom_call.1} parent=1 // pred_check_branch
      %29 = sbr.rel (0) target = $region29
    $region28: #{tpu_custom_call.1} parent=1 // pred_region
      _
    $region29: #{tpu_custom_call.1} parent=1 // pred_fallthru
      _
    // Predicated region
    $region30: #{tpu_custom_call.1} parent=1 // pred_check
      _
    $region31: #{tpu_custom_call.1} parent=1 // pred_check_branch
      %31 = sbr.rel (0) target = $region33
    $region32: #{tpu_custom_call.1} parent=1 // pred_region
      _
    $region33: #{tpu_custom_call.1} parent=1 // pred_fallthru
      _
    %v33 = vld [vmem:[%s0] sm:$0xf]
    %v34 = vld [vmem:[%s0 + $0x4] sm:$0xf]
    %v35 = vld [vmem:[%s3] sm:$0xf]
    %v36 = vld [vmem:[%s3 + $0x4] sm:$0xf]
    %v37 = vld [vmem:[%s3 + $0x8] sm:$0xf]
    %v38 = vld [vmem:[%s3 + $0xc] sm:$0xf]
    %v39 = vld [vmem:[%s4] sm:$0x1]
    %v41 = vlaneseq
    %v42 = vshrl.u32 %v41, 7
    %v43 = vsub.s32 0, %v42
    %v44 = vrot.slane %v39, %v43
    %v48 = vunpack.c.l.b16 %v33
    %v49 = vunpack.c.l.b16 %v34
    %v50 = vpack.c.b16 %v49, %v48
    %v55 = vunpack.c.l.b16 %v35
    %v56 = vunpack.c.l.b16 %v36
    %v57 = vunpack.c.l.b16 %v37
    %v58 = vunpack.c.l.b16 %v38
    %v59 = vpack.c.b16 %v56, %v55
    %v60 = vpack.c.b16 %v58, %v57
    %vm63 = vcmask 261120
    %v65 = vsel %vm63, %v50, 0
    %67 = vmatprep.subr.bf16.mxu0 0
    %68 = vmatpush1.bf16.msra.mxu0 0
    %69 = vmatprep.subr.bf16.mxu0 0
    %70 = vmatpush1.bf16.msra.mxu0 0
    %71 = vmatprep.subr.bf16.mxu0 0
    %72 = vmatpush1.bf16.msra.mxu0 0
    %73 = vmatprep.subr.bf16.mxu0 0
    %74 = vmatpush1.bf16.msra.mxu0 0
    %75 = vmatprep.subr.bf16.mxu0 0
    %76 = vmatpush1.bf16.msra.mxu0 0
    %77 = vmatprep.subr.bf16.mxu0 0
    %78 = vmatpush1.bf16.msra.mxu0 0
    %79 = vmatprep.subr.bf16.mxu0 0
    %80 = vmatpush1.bf16.msra.mxu0 %v60
    %81 = vmatprep.subr.bf16.mxu0 0
    %82 = vmatpush1.bf16.msra.mxu0 %v59
    %83 = vmatprep.subr.bf16.mxu0 0
    %84 = vmatpush2.bf16.msra.mxu0 0
    %85 = vmatprep.subr.bf16.mxu0 0
    %86 = vmatpush2.bf16.msra.mxu0 0
    %87 = vmatprep.subr.bf16.mxu0 0
    %88 = vmatpush2.bf16.msra.mxu0 0
    %89 = vmatprep.subr.bf16.mxu0 0
    %90 = vmatpush2.bf16.msra.mxu0 0
    %91 = vmatprep.subr.bf16.mxu0 0
    %92 = vmatpush2.bf16.msra.mxu0 0
    %93 = vmatprep.subr.bf16.mxu0 0
    %94 = vmatpush2.bf16.msra.mxu0 0
    %95 = vmatprep.subr.bf16.mxu0 0
    %96 = vmatpush2.bf16.msra.mxu0 0
    %97 = vmatprep.subr.bf16.mxu0 0
    %98 = vmatpush2.bf16.msra.mxu0 0
    %99 = vmatprep.mubr.bf16.mxu0 0
    %100 = vmatmul.mubr.bf16.gmra.mxu0 %v65
    %v101 = vpop.f32.mrf.mxu0
    %v102 = vadd.f32 %v44, %v101
    %v103 = vpop.f32.mrf.mxu0
    %v104 = vpop.f32.mrf.mxu0
    %v105 = vadd.f32 %v44, %v104
    %v106 = vpop.f32.mrf.mxu0
    %107 = vdwg.mxu0
    %v108 = vpack.c.bf16 %v105, %v102
    %v109 = vld [vmem:[%s1] sm:$0xf]
    %v110 = vld [vmem:[%s1 + $0x4] sm:$0xf]
    %v111 = vld [vmem:[%s1 + $0x8] sm:$0xf]
    %v112 = vld [vmem:[%s1 + $0xc] sm:$0xf]
    %v113 = vld [vmem:[%s5] sm:$0x1]
    %v115 = vlaneseq
    %v116 = vshrl.u32 %v115, 7
    %v117 = vsub.s32 0, %v116
    %v118 = vrot.slane %v113, %v117
    %v124 = vunpack.c.l.b16 %v109
    %v125 = vunpack.c.l.b16 %v110
    %v126 = vunpack.c.l.b16 %v111
    %v127 = vunpack.c.l.b16 %v112
    %v128 = vpack.c.b16 %v125, %v124
    %v129 = vpack.c.b16 %v127, %v126
    %v133 = vsel %vm63, %v108, 0
    %135 = vmatprep.subr.bf16.mxu0 0
    %136 = vmatpush1.bf16.msra.mxu0 0
    %137 = vmatprep.subr.bf16.mxu0 0
    %138 = vmatpush1.bf16.msra.mxu0 0
    %139 = vmatprep.subr.bf16.mxu0 0
    %140 = vmatpush1.bf16.msra.mxu0 0
    %141 = vmatprep.subr.bf16.mxu0 0
    %142 = vmatpush1.bf16.msra.mxu0 0
    %143 = vmatprep.subr.bf16.mxu0 0
    %144 = vmatpush1.bf16.msra.mxu0 0
    %145 = vmatprep.subr.bf16.mxu0 0
    %146 = vmatpush1.bf16.msra.mxu0 0
    %147 = vmatprep.subr.bf16.mxu0 0
    %148 = vmatpush1.bf16.msra.mxu0 %v129
    %149 = vmatprep.subr.bf16.mxu0 0
    %150 = vmatpush1.bf16.msra.mxu0 %v128
    %151 = vmatprep.subr.bf16.mxu0 0
    %152 = vmatpush2.bf16.msra.mxu0 0
    %153 = vmatprep.subr.bf16.mxu0 0
    %154 = vmatpush2.bf16.msra.mxu0 0
    %155 = vmatprep.subr.bf16.mxu0 0
    %156 = vmatpush2.bf16.msra.mxu0 0
    %157 = vmatprep.subr.bf16.mxu0 0
    %158 = vmatpush2.bf16.msra.mxu0 0
    %159 = vmatprep.subr.bf16.mxu0 0
    %160 = vmatpush2.bf16.msra.mxu0 0
    %161 = vmatprep.subr.bf16.mxu0 0
    %162 = vmatpush2.bf16.msra.mxu0 0
    %163 = vmatprep.subr.bf16.mxu0 0
    %164 = vmatpush2.bf16.msra.mxu0 0
    %165 = vmatprep.subr.bf16.mxu0 0
    %166 = vmatpush2.bf16.msra.mxu0 0
    %167 = vmatprep.mubr.bf16.mxu0 0
    %168 = vmatmul.mubr.bf16.gmra.mxu0 %v133
    %v169 = vpop.f32.mrf.mxu0
    %v170 = vadd.f32 %v118, %v169
    %v171 = vpop.f32.mrf.mxu0
    %v172 = vpop.f32.mrf.mxu0
    %v173 = vadd.f32 %v118, %v172
    %v174 = vpop.f32.mrf.mxu0
    %175 = vdwg.mxu0
    %176 = vmax.xlane.f32.xlu0 %v170
    %v177 = vpop.xlane.xlu0 %176
    %178 = vmax.xlane.f32.xlu0 %v173
    %v179 = vpop.xlane.xlu0 %178
    %v180 = vsub.f32 %v170, %v177
    %v181 = vsub.f32 %v173, %v179
    %v182 = vmul.f32 %v180, 1.442695
    %v183 = vpow.pop %v182
    %v184 = vmul.f32 %v181, 1.442695
    %v185 = vpow.pop %v184
    %186 = vadd.xlane.f32.xlu0 %v183
    %v187 = vpop.xlane.xlu0 %186
    %188 = vadd.xlane.f32.xlu0 %v185
    %v189 = vpop.xlane.xlu0 %188
    %v190 = vrcp.pop %v187
    %v191 = vmul.f32 %v183, %v190
    %v192 = vrcp.pop %v189
    %v193 = vmul.f32 %v185, %v192
    %v194 = vpack.c.bf16 %v193, %v191
    %v195 = vld [vmem:[%s2] sm:$0xf]
    %v196 = vld [vmem:[%s2 + $0x4] sm:$0xf]
    %v197 = vld [vmem:[%s2 + $0x8] sm:$0xf]
    %v198 = vld [vmem:[%s2 + $0xc] sm:$0xf]
    %v199 = vld [vmem:[%s2 + $0x10] sm:$0xf]
    %v200 = vld [vmem:[%s2 + $0x14] sm:$0xf]
    %v201 = vld [vmem:[%s2 + $0x18] sm:$0xf]
    %v202 = vld [vmem:[%s2 + $0x1c] sm:$0xf]
    %v203 = vld [vmem:[%s2 + $0x20] sm:$0xf]
    %v204 = vld [vmem:[%s2 + $0x24] sm:$0xf]
    %v205 = vld [vmem:[%s2 + $0x28] sm:$0xf]
    %v206 = vld [vmem:[%s2 + $0x2c] sm:$0xf]
    %v207 = vld [vmem:[%s2 + $0x30] sm:$0xf]
    %v208 = vld [vmem:[%s2 + $0x34] sm:$0xf]
    %v209 = vld [vmem:[%s2 + $0x38] sm:$0xf]
    %v210 = vld [vmem:[%s2 + $0x3c] sm:$0xf]
    %v227 = vunpack.c.l.b16 %v195
    %v228 = vunpack.c.l.b16 %v196
    %v229 = vunpack.c.l.b16 %v197
    %v230 = vunpack.c.l.b16 %v198
    %v231 = vunpack.c.l.b16 %v199
    %v232 = vunpack.c.l.b16 %v200
    %v233 = vunpack.c.l.b16 %v201
    %v234 = vunpack.c.l.b16 %v202
    %v235 = vunpack.c.l.b16 %v203
    %v236 = vunpack.c.l.b16 %v204
    %v237 = vunpack.c.l.b16 %v205
    %v238 = vunpack.c.l.b16 %v206
    %v239 = vunpack.c.l.b16 %v207
    %v240 = vunpack.c.l.b16 %v208
    %v241 = vunpack.c.l.b16 %v209
    %v242 = vunpack.c.l.b16 %v210
    %v243 = vpack.c.b16 %v228, %v227
    %v244 = vpack.c.b16 %v230, %v229
    %v245 = vpack.c.b16 %v232, %v231
    %v246 = vpack.c.b16 %v234, %v233
    %v247 = vpack.c.b16 %v236, %v235
    %v248 = vpack.c.b16 %v238, %v237
    %v249 = vpack.c.b16 %v240, %v239
    %v250 = vpack.c.b16 %v242, %v241
    %259 = vmatprep.subr.bf16.mxu0 0
    %260 = vmatpush1.bf16.msra.mxu0 %v250
    %261 = vmatprep.subr.bf16.mxu0 0
    %262 = vmatpush1.bf16.msra.mxu0 %v249
    %263 = vmatprep.subr.bf16.mxu0 0
    %264 = vmatpush1.bf16.msra.mxu0 %v248
    %265 = vmatprep.subr.bf16.mxu0 0
    %266 = vmatpush1.bf16.msra.mxu0 %v247
    %267 = vmatprep.subr.bf16.mxu0 0
    %268 = vmatpush1.bf16.msra.mxu0 %v246
    %269 = vmatprep.subr.bf16.mxu0 0
    %270 = vmatpush1.bf16.msra.mxu0 %v245
    %271 = vmatprep.subr.bf16.mxu0 0
    %272 = vmatpush1.bf16.msra.mxu0 %v244
    %273 = vmatprep.subr.bf16.mxu0 0
    %274 = vmatpush1.bf16.msra.mxu0 %v243
    %275 = vmatprep.subr.bf16.mxu0 0
    %276 = vmatpush2.bf16.msra.mxu0 0
    %277 = vmatprep.subr.bf16.mxu0 0
    %278 = vmatpush2.bf16.msra.mxu0 0
    %279 = vmatprep.subr.bf16.mxu0 0
    %280 = vmatpush2.bf16.msra.mxu0 0
    %281 = vmatprep.subr.bf16.mxu0 0
    %282 = vmatpush2.bf16.msra.mxu0 0
    %283 = vmatprep.subr.bf16.mxu0 0
    %284 = vmatpush2.bf16.msra.mxu0 0
    %285 = vmatprep.subr.bf16.mxu0 0
    %286 = vmatpush2.bf16.msra.mxu0 0
    %287 = vmatprep.subr.bf16.mxu0 0
    %288 = vmatpush2.bf16.msra.mxu0 0
    %289 = vmatprep.subr.bf16.mxu0 0
    %290 = vmatpush2.bf16.msra.mxu0 0
    %291 = vmatprep.mubr.bf16.mxu0 0
    %292 = vmatmul.mubr.bf16.gmra.mxu0 %v194
    %v293 = vpop.f32.mrf.mxu0
    %v294 = vadd.f32 0.0, %v293
    %v295 = vpop.f32.mrf.mxu0
    %v296 = vpop.f32.mrf.mxu0
    %v297 = vadd.f32 0.0, %v296
    %v298 = vpop.f32.mrf.mxu0
    %299 = vdwg.mxu0
    %v300 = vsel %vm63, %v294, 0.0
    %301 = vadd.xlane.f32.xlu0 %v300
    %v302 = vpop.xlane.xlu0 %301
    %v303 = vsel %vm63, %v297, 0.0
    %304 = vadd.xlane.f32.xlu0 %v303
    %v305 = vpop.xlane.xlu0 %304
    %v306 = vrcp.pop 32.0
    %v307 = vmul.f32 %v302, %v306
    %v308 = vmul.f32 %v305, %v306
    %v309 = vsub.f32 %v294, %v307
    %v310 = vsub.f32 %v297, %v308
    %v311 = vmul.f32 %v309, %v309
    %v312 = vmul.f32 %v310, %v310
    %v313 = vsel %vm63, %v311, 0.0
    %314 = vadd.xlane.f32.xlu0 %v313
    %v315 = vpop.xlane.xlu0 %314
    %v316 = vsel %vm63, %v312, 0.0
    %317 = vadd.xlane.f32.xlu0 %v316
    %v318 = vpop.xlane.xlu0 %317
    %v319 = vmul.f32 %v315, %v306
    %v320 = vmul.f32 %v318, %v306
    %v321 = vadd.f32 %v319, 1e-05
    %v322 = vadd.f32 %v320, 1e-05
    %v323 = vrsqrt.pop %v321
    %v324 = vrsqrt.pop %v322
    %v325 = vmul.f32 %v309, %v323
    %v326 = vmul.f32 %v310, %v324
    %v327 = vld [vmem:[%s6] sm:$0x1]
    %v329 = vlaneseq
    %v330 = vshrl.u32 %v329, 7
    %v331 = vsub.s32 0, %v330
    %v332 = vrot.slane %v327, %v331
    %v334 = vmul.f32 %v325, %v332
    %v335 = vmul.f32 %v326, %v332
    %v336 = vld [vmem:[%s7] sm:$0x1]
    %v338 = vlaneseq
    %v339 = vshrl.u32 %v338, 7
    %v340 = vsub.s32 0, %v339
    %v341 = vrot.slane %v336, %v340
    %v343 = vadd.f32 %v334, %v341
    %v344 = vadd.f32 %v335, %v341
    %345 = vst.msk [vmem:[#allocation2] sm:$0xff] %vm63, %v343
    %346 = vst.msk [vmem:[#allocation2 + $0x8] sm:$0xff] %vm63, %v344
    %vm347 = vcmask 56320
    %348 = vst.msk [vmem:[%s9] sm:$0xff] %vm347, %v191
    %349 = vst.msk [vmem:[%s9 + $0x8] sm:$0xff] %vm347, %v193
    // Predicated region
    $region34: #{tpu_custom_call.1} parent=1 // pred_check
      _
    $region35: #{tpu_custom_call.1} parent=1 // pred_check_branch
      %351 = sbr.rel (0) target = $region37
    $region36: #{tpu_custom_call.1} parent=1 // pred_region
      %s353 = ssub.s32 256, 256
      %354 = vsyncadd [#allocation3], %s353
      %s355 = sshll.u32 [#allocation2], 4
      %s356 = int_to_ptr.vmem [resolvable:$true] %s355
      %361 = dma.vmem_to_hbm [thread:$0]  %s356, 256, %s8, [#allocation3], 128, 128, 8
    $region37: #{tpu_custom_call.1} parent=1 // pred_fallthru
      _
    // Predicated region
    $region38: #{tpu_custom_call.1} parent=1 // pred_check
      _
    $region39: #{tpu_custom_call.1} parent=1 // pred_check_branch
      %363 = sbr.rel (0) target = $region41
    $region40: #{tpu_custom_call.1} parent=1 // pred_region
      _
    $region41: #{tpu_custom_call.1} parent=1 // pred_fallthru
      _
    // Predicated region
    $region42: #{tpu_custom_call.1} parent=1 // pred_check
      _
    $region43: #{tpu_custom_call.1} parent=1 // pred_check_branch
      %365 = sbr.rel (0) target = $region45
    $region44: #{tpu_custom_call.1} parent=1 // pred_region
      %366 = dma.done [#allocation3], 256
    $region45: #{tpu_custom_call.1} parent=1 // pred_fallthru
      _
    // Predicated region
    $region46: #{tpu_custom_call.1} parent=1 // pred_check
      _
    $region47: #{tpu_custom_call.1} parent=1 // pred_check_branch
      %368 = sbr.rel (0) target = $region49
    $region48: #{tpu_custom_call.1} parent=1 // pred_region
      _
    $region49: #{tpu_custom_call.1} parent=1 // pred_fallthru
      _
    %369 = vsyncpa [#allocation3], 1

</llo_original>
